<compile_context>
chip_gen: v7x
topology: tpu7x:2x2x1
jax: 0.10.0
libtpu: 0.0.40
codegen_flags: <defaults>
</compile_context>

<pallas_src>
import math
from functools import partial
from typing import NamedTuple, Optional

import jax
import jax.numpy as jnp
from jax.experimental import pallas as pl
from jax.experimental.pallas import tpu as pltpu

LOG_STD_MIN = -2.0
LOG_STD_MAX = 20.0


class Normal(NamedTuple):
    """Lightweight stand-in for torch.distributions.Normal parameters."""
    loc: jax.Array
    scale: jax.Array


# --------------------------------------------------------------------------
# Kernels
# --------------------------------------------------------------------------

def _gaussian_kernel_split(mu_in, ls_in, mu_out, std_out, *, lo, hi):
    # Aligned path (D % 128 == 0): mu is a straight VMEM tile pass-through,
    # log_std tile -> clamp -> exp (f32 internally), no lane slicing.
    mu_out[...] = mu_in[...]
    log_std = ls_in[...].astype(jnp.float32)
    std_out[...] = jnp.exp(jnp.clip(log_std, lo, hi)).astype(std_out.dtype)


def _gaussian_kernel_fused(x_ref, mu_out, std_out, *, d, lo, hi):
    # Unaligned path: slice the Ref (zero-cost view), not a loaded value.
    mu_out[...] = x_ref[:, :d]
    log_std = x_ref[:, d:].astype(jnp.float32)
    std_out[...] = jnp.exp(jnp.clip(log_std, lo, hi)).astype(std_out.dtype)


# --------------------------------------------------------------------------
# Tiling heuristics
# --------------------------------------------------------------------------

def _cdiv(a: int, b: int) -> int:
    return -(-a // b)


def _sublane(itemsize: int) -> int:
    # f32 -> 8, bf16 -> 16, int8/fp8 -> 32 rows per packed sublane group.
    return max(8, 32 // max(1, itemsize))


def _streaming_config():
    """(target input bytes per grid step, vmem_limit_bytes or None)."""
    kind = ""
    try:
        kind = jax.devices()[0].device_kind.lower()
    except Exception:  # pragma: no cover - e.g. no devices at trace time
        pass
    if "7" in kind:                      # v7x: 3.2 TB/s HBM, 64 MiB VMEM/TC
        return 8 << 20, 48 << 20
    if "v6" in kind or "6e" in kind:     # v6e: 128 MiB VMEM, 32 MiB scoped default
        return 4 << 20, 64 << 20
    return 2 << 20, None                 # v5e / unknown: 16 MiB scoped default


def _pick_block_rows(batch: int, row_bytes: int, itemsize: int,
                     target_bytes: int) -> int:
    """Rows per block so one input slab is ~target_bytes (dtype-aware align)."""
    sub = _sublane(itemsize)
    rows = max(1, target_bytes // max(1, row_bytes))
    if rows >= batch:
        # Whole batch fits in one block; still split into >=2 grid steps when
        # possible so both v7x TensorCores get work and the pipeline overlaps.
        if batch >= 2 * sub:
            return min(batch, sub * _cdiv(_cdiv(batch, 2), sub))
        return batch
    rows = max(sub, (rows // sub) * sub)
    return min(rows, batch)


def _pick_feat_block(d: int, tb: int, itemsize: int, target_bytes: int) -> int:
    """Feature tile (multiple of 128, divides d) bounding 2*tb*tf*itemsize."""
    cap = max(128, target_bytes // max(1, 2 * tb * itemsize))
    tf = max(128, min(d, (cap // 128) * 128))
    while d % tf:
        tf -= 128
    return tf


# --------------------------------------------------------------------------
# Wrapper
# --------------------------------------------------------------------------

def _reference(x: jax.Array,
               log_std_min: float = LOG_STD_MIN,
               log_std_max: float = LOG_STD_MAX) -> Normal:
    d = x.shape[-1] // 2
    mu = x[..., :d]
    log_std = x[..., d:]
    return Normal(mu, jnp.exp(jnp.clip(log_std, log_std_min, log_std_max)))


def gaussian_from_mu_log_std(x: jax.Array,
                             log_std_min: float = LOG_STD_MIN,
                             log_std_max: float = LOG_STD_MAX,
                             block_rows: Optional[int] = None,
                             use_pallas: Optional[bool] = None,
                             min_pallas_bytes: int = 4 << 20) -> Normal:
    """x: (..., 2*D). Returns Normal(loc=(..., D), scale=(..., D))."""
    *lead, two_d = x.shape
    assert two_d % 2 == 0, "last dim must be even (mu | log_std)"
    d = two_d // 2
    b = math.prod(lead) if lead else 1

    itemsize = jnp.dtype(x.dtype).itemsize
    total_bytes = b * two_d * itemsize
    if use_pallas is None:
        use_pallas = total_bytes >= min_pallas_bytes
    if not use_pallas:
        # Tiny policy-head tensors: let XLA fuse clamp+exp with neighbors
        # instead of paying a pallas_call + HBM round-trip.
        return _reference(x, log_std_min, log_std_max)

    x2 = x.reshape(b, two_d)               # free view: flatten leading dims

    target_bytes, vmem_limit = _streaming_config()
    row_bytes = two_d * itemsize
    tb = block_rows if block_rows is not None else _pick_block_rows(
        b, row_bytes, itemsize, target_bytes)
    tb = max(1, min(tb, b))

    lo, hi = float(log_std_min), float(log_std_max)

    if d % 128 == 0:
        # Aligned path: two half-width input specs (mu half / log_std half),
        # optional feature-axis tiling to bound VMEM for very wide D.
        tf = _pick_feat_block(d, tb, itemsize, target_bytes)
        nfb = d // tf
        grid = (_cdiv(b, tb), nfb)
        kernel = partial(_gaussian_kernel_split, lo=lo, hi=hi)
        in_specs = [
            pl.BlockSpec((tb, tf), lambda i, j: (i, j)),            # mu half
            pl.BlockSpec((tb, tf), lambda i, j: (i, nfb + j)),      # log_std half
        ]
        out_specs = (
            pl.BlockSpec((tb, tf), lambda i, j: (i, j)),
            pl.BlockSpec((tb, tf), lambda i, j: (i, j)),
        )
        dims = ("parallel", "parallel")
        operands = (x2, x2)
    else:
        # Unaligned path: full-row block, Ref slices inside the kernel.
        # TODO(synk): feature-axis tiling for unaligned, extremely wide D
        # (2*D*itemsize > VMEM budget) is not implemented; rows=1 is the floor.
        grid = (_cdiv(b, tb),)
        kernel = partial(_gaussian_kernel_fused, d=d, lo=lo, hi=hi)
        in_specs = [pl.BlockSpec((tb, two_d), lambda i: (i, 0))]
        out_specs = (
            pl.BlockSpec((tb, d), lambda i: (i, 0)),
            pl.BlockSpec((tb, d), lambda i: (i, 0)),
        )
        dims = ("parallel",)
        operands = (x2,)

    mu, std = pl.pallas_call(
        kernel,
        grid=grid,
        in_specs=in_specs,
        out_specs=out_specs,
        out_shape=(
            jax.ShapeDtypeStruct((b, d), x.dtype),
            jax.ShapeDtypeStruct((b, d), x.dtype),
        ),
        compiler_params=pltpu.CompilerParams(
            dimension_semantics=dims,
            vmem_limit_bytes=vmem_limit,
        ),
    )(*operands)

    out_shape = tuple(lead) + (d,)
    return Normal(mu.reshape(out_shape), std.reshape(out_shape))


# --------------------------------------------------------------------------
# Tests
# --------------------------------------------------------------------------

if __name__ == "__main__":
    key = jax.random.PRNGKey(0)
    k1, k2, k3 = jax.random.split(key, 3)

    # 1) Tiny policy-head shape (B=2, 2*D=64), f32.
    B, D = 2, 32
    x = jax.random.normal(k1, (B, 2 * D), dtype=jnp.float32) * 4.0  # exercise clamp
    ref = _reference(x)

    #    a) Auto path -> pure-JAX fallback for tiny tensors.
    dist_fb = gaussian_from_mu_log_std(x)
    jax.block_until_ready(dist_fb.loc)
    assert dist_fb.loc.shape == (B, D) and dist_fb.scale.shape == (B, D)
    assert jnp.allclose(dist_fb.loc, ref.loc, atol=1e-6), "mu mismatch (fallback)"
    assert jnp.allclose(dist_fb.scale, ref.scale, rtol=1e-6, atol=1e-6), \
        "std mismatch (fallback)"

    #    b) Forced Pallas path (D not 128-aligned -> fused single-spec kernel).
    dist = gaussian_from_mu_log_std(x, use_pallas=True)
    jax.block_until_ready(dist.loc)
    jax.block_until_ready(dist.scale)
    assert jnp.allclose(dist.loc, ref.loc, atol=1e-6), "mu mismatch (pallas)"
    assert jnp.allclose(dist.scale, ref.scale, rtol=1e-6, atol=1e-6), \
        "std mismatch (pallas)"

    # 2) 128-aligned D: dual half-width BlockSpecs, multi-step pipelined grid
    #    (TB=16 -> 3 row blocks), lane-dense outputs.
    B2, D2 = 48, 256
    x_big = jax.random.normal(k2, (B2, 2 * D2), dtype=jnp.float32) * 4.0
    dist_big = gaussian_from_mu_log_std(x_big, use_pallas=True, block_rows=16)
    jax.block_until_ready(dist_big.loc)
    jax.block_until_ready(dist_big.scale)
    ref_big = _reference(x_big)
    assert jnp.allclose(dist_big.loc, ref_big.loc, atol=1e-6), "mu mismatch (tiled)"
    assert jnp.allclose(dist_big.scale, ref_big.scale, rtol=1e-6, atol=1e-6), \
        "std mismatch (tiled)"

    # 3) bf16 input, aligned path, auto block sizing (dtype-aware sublane
    #    alignment + grid split into >=2 steps), with leading batch dims.
    B3, D3 = 32, 128
    x_bf = (jax.random.normal(k3, (2, B3 // 2, 2 * D3), dtype=jnp.float32) * 4.0
            ).astype(jnp.bfloat16)
    dist_bf = gaussian_from_mu_log_std(x_bf, use_pallas=True)
    jax.block_until_ready(dist_bf.loc)
    jax.block_until_ready(dist_bf.scale)
    xf = x_bf.astype(jnp.float32)
    ref_bf = Normal(xf[..., :D3].astype(jnp.bfloat16),
                    jnp.exp(jnp.clip(xf[..., D3:], LOG_STD_MIN, LOG_STD_MAX)
                            ).astype(jnp.bfloat16))
    assert dist_bf.loc.shape == (2, B3 // 2, D3)
    assert jnp.array_equal(dist_bf.loc, ref_bf.loc), "mu mismatch (bf16)"
    assert jnp.allclose(dist_bf.scale.astype(jnp.float32),
                        ref_bf.scale.astype(jnp.float32),
                        rtol=1e-2, atol=1e-2), "std mismatch (bf16)"

    print("KERNEL_OK")
</pallas_src>

<mosaic_0001>
module attributes {stable_mosaic.version = 11 : i64} {
  func.func @_gaussian_kernel_fused(%arg0: i32, %arg1: memref<2x64xf32, #tpu.memory_space<vmem>>, %arg2: memref<2x32xf32, #tpu.memory_space<vmem>>, %arg3: memref<2x32xf32, #tpu.memory_space<vmem>>) attributes {dimension_semantics = [#tpu.dimension_semantics<parallel>], iteration_bounds = array<i64: 1>, scalar_prefetch = 0 : i64, scratch_operands = 0 : i64, tpu.core_type = #tpu.core_type<tc>, window_params = [{transform_indices = @transform_0, window_bounds = array<i64: 2, 64>}, {transform_indices = @transform_1, window_bounds = array<i64: 2, 32>}, {transform_indices = @transform_2, window_bounds = array<i64: 2, 32>}]} {
    %c0 = arith.constant 0 : index
    %c0_0 = arith.constant 0 : index
    %0 = vector.load %arg1[%c0, %c0_0] : memref<2x64xf32, #tpu.memory_space<vmem>>, vector<2x32xf32>
    %c0_1 = arith.constant 0 : index
    %c0_2 = arith.constant 0 : index
    %1 = vector.load %arg2[%c0_1, %c0_2] : memref<2x32xf32, #tpu.memory_space<vmem>>, vector<2x32xf32>
    tpu.vector_store %arg2[%c0_1, %c0_2], %0 {strides = array<i32>} : memref<2x32xf32, #tpu.memory_space<vmem>>, vector<2x32xf32>,
    %c0_3 = arith.constant 0 : index
    %c32 = arith.constant 32 : index
    %2 = vector.load %arg1[%c0_3, %c32] : memref<2x64xf32, #tpu.memory_space<vmem>>, vector<2x32xf32>
    %cst = arith.constant -2.000000e+00 : f32
    %cst_4 = arith.constant 2.000000e+01 : f32
    %3 = vector.broadcast %cst : f32 to vector<2x32xf32>
    %4 = arith.maximumf %3, %2 : vector<2x32xf32>
    %5 = vector.broadcast %cst_4 : f32 to vector<2x32xf32>
    %6 = arith.minimumf %5, %4 : vector<2x32xf32>
    %7 = math.exp %6 : vector<2x32xf32>
    %c0_5 = arith.constant 0 : index
    %c0_6 = arith.constant 0 : index
    %8 = vector.load %arg3[%c0_5, %c0_6] : memref<2x32xf32, #tpu.memory_space<vmem>>, vector<2x32xf32>
    tpu.vector_store %arg3[%c0_5, %c0_6], %7 {strides = array<i32>} : memref<2x32xf32, #tpu.memory_space<vmem>>, vector<2x32xf32>,
    return
  }
  func.func @transform_0(%arg0: i32) -> (i32, i32) {
    %c0_i32 = arith.constant 0 : i32
    %c0_i32_0 = arith.constant 0 : i32
    return %arg0, %c0_i32 : i32, i32
  }
  func.func @transform_1(%arg0: i32) -> (i32, i32) {
    %c0_i32 = arith.constant 0 : i32
    %c0_i32_0 = arith.constant 0 : i32
    return %arg0, %c0_i32 : i32, i32
  }
  func.func @transform_2(%arg0: i32) -> (i32, i32) {
    %c0_i32 = arith.constant 0 : i32
    %c0_i32_0 = arith.constant 0 : i32
    return %arg0, %c0_i32 : i32, i32
  }
}

</mosaic_0001>

<llo_original>
// kernel: tpu_custom_call.1
$region0: #{tpu_custom_call.1}
  #allocation0 [shape = 'u32[]', space=smem, size = 0x4, offset = 0x4, fixed_abs, tag = 'smem constant byte address 0x4 - core index']
  #allocation1 [shape = 'u32[144,128]{1,0:T(1,128)}', space=vmem, size = 0x12000, scoped, tag = 'internal scratch']
  %s0 = inlined_call_operand.hbm [shape: f32[2,64], index: 0, kind: input, shape index: {}]
  %s1 = inlined_call_operand.hbm [shape: f32[2,32], index: 1, kind: output, shape index: {0}]
  %s2 = inlined_call_operand.hbm [shape: f32[2,32], index: 2, kind: output, shape index: {1}]
  %3 = xla_tuple %s1, %s2
  %s4 = sld [smem:[#allocation0]]
  $region26: #{tpu_custom_call.1} parent=0
    _
  %s6 = ssub.s32 1, %s4
  %s7 = scalar_select 0, %s6, %s4
  $region1: #{tpu_custom_call.1} parent=0
    #allocation2 [shape = 'u8[1024]{0}', space=vmem, size = 0x400, scoped, tag = 'input window, operand 0, single buffered']
    #allocation3 [shape = 's32[1]{0}', space=sflag, size = 0x4, scoped, tag = 'scoped memory for tpu_custom_call.1']
    #allocation4 [shape = 's32[1]{0}', space=sflag, size = 0x4, scoped, tag = 'scoped memory for tpu_custom_call.1']
    #allocation5 [shape = 'u8[1024]{0}', space=vmem, size = 0x400, scoped, tag = 'output window, operand 0, single buffered']
    #allocation6 [shape = 'u8[1024]{0}', space=vmem, size = 0x400, scoped, tag = 'output window, operand 1, single buffered']
    #allocation7 [shape = 's32[1]{0}', space=sflag, size = 0x4, scoped, tag = 'scoped memory for tpu_custom_call.1']
    %8 = vsyncpa [#allocation3], 0
    %9 = vsyncpa [#allocation4], 0
    %10 = vsyncpa [#allocation7], 0
    // Predicated region
    $region2: #{tpu_custom_call.1} parent=1 // pred_check
      _
    $region3: #{tpu_custom_call.1} parent=1 // pred_check_branch
      %12 = sbr.rel (0) target = $region5
    $region4: #{tpu_custom_call.1} parent=1 // pred_region
      %s14 = ssub.s32 32, 32
      %15 = vsyncadd [#allocation3], %s14
      %s17 = sshll.u32 [#allocation2], 4
      %s18 = int_to_ptr.vmem [resolvable:$true] %s17
      %20 = dma.hbm_to_vmem [thread:$0]  %s0, 32, %s18, [#allocation3]
    $region5: #{tpu_custom_call.1} parent=1 // pred_fallthru
      _
    // Predicated region
    $region6: #{tpu_custom_call.1} parent=1 // pred_check
      _
    $region7: #{tpu_custom_call.1} parent=1 // pred_check_branch
      %22 = sbr.rel (0) target = $region9
    $region8: #{tpu_custom_call.1} parent=1 // pred_region
      %23 = dma.done [#allocation3], 32
    $region9: #{tpu_custom_call.1} parent=1 // pred_fallthru
      _
    %v24 = vld [vmem:[#allocation2] sm:$0x3]
    %vm25 = vcmask 254976
    %26 = vst.msk [vmem:[#allocation5] sm:$0x3] %vm25, %v24
    %v27 = vld [vmem:[#allocation2] sm:$0x3]
    %v28 = vmax.f32 %v27, -2.0
    %v29 = vmin.f32 %v28, 20.0
    %v30 = vmul.f32 %v29, 1.442695
    %v31 = vpow.pop %v30
    %33 = vrot.lane.b32.xlu0 %v31, 96
    %v34 = vpop.permute.xlu0 %33
    %36 = vst.msk [vmem:[#allocation6] sm:$0x3] %vm25, %v34
    // Predicated region
    $region10: #{tpu_custom_call.1} parent=1 // pred_check
      _
    $region11: #{tpu_custom_call.1} parent=1 // pred_check_branch
      %38 = sbr.rel (0) target = $region13
    $region12: #{tpu_custom_call.1} parent=1 // pred_region
      %s40 = ssub.s32 32, 32
      %41 = vsyncadd [#allocation4], %s40
      %s43 = sshll.u32 [#allocation5], 4
      %s44 = int_to_ptr.vmem [resolvable:$true] %s43
      %46 = dma.vmem_to_hbm [thread:$0]  %s44, 32, %s1, [#allocation4]
    $region13: #{tpu_custom_call.1} parent=1 // pred_fallthru
      _
    // Predicated region
    $region14: #{tpu_custom_call.1} parent=1 // pred_check
      _
    $region15: #{tpu_custom_call.1} parent=1 // pred_check_branch
      %48 = sbr.rel (0) target = $region17
    $region16: #{tpu_custom_call.1} parent=1 // pred_region
      %s50 = ssub.s32 32, 32
      %51 = vsyncadd [#allocation7], %s50
      %s53 = sshll.u32 [#allocation6], 4
      %s54 = int_to_ptr.vmem [resolvable:$true] %s53
      %56 = dma.vmem_to_hbm [thread:$0]  %s54, 32, %s2, [#allocation7]
    $region17: #{tpu_custom_call.1} parent=1 // pred_fallthru
      _
    // Predicated region
    $region18: #{tpu_custom_call.1} parent=1 // pred_check
      _
    $region19: #{tpu_custom_call.1} parent=1 // pred_check_branch
      %58 = sbr.rel (0) target = $region21
    $region20: #{tpu_custom_call.1} parent=1 // pred_region
      %59 = dma.done [#allocation4], 32
    $region21: #{tpu_custom_call.1} parent=1 // pred_fallthru
      _
    // Predicated region
    $region22: #{tpu_custom_call.1} parent=1 // pred_check
      _
    $region23: #{tpu_custom_call.1} parent=1 // pred_check_branch
      %61 = sbr.rel (0) target = $region25
    $region24: #{tpu_custom_call.1} parent=1 // pred_region
      %62 = dma.done [#allocation7], 32
    $region25: #{tpu_custom_call.1} parent=1 // pred_fallthru
      _
    %63 = vsyncpa [#allocation3], 1
    %64 = vsyncpa [#allocation4], 1
    %65 = vsyncpa [#allocation7], 1

</llo_original>
